<compile_context>
chip_gen: v6e
topology: v6e:2x2x1
jax: 0.10.0
libtpu: 0.0.40
codegen_flags: <defaults>
</compile_context>

<pallas_src>
import math
import functools

import jax
import jax.numpy as jnp
from jax.experimental import pallas as pl
from jax.experimental.pallas import tpu as pltpu

LANE = 128


# ----------------------------------------------------------------------------
# Fused kernel
# ----------------------------------------------------------------------------
def fused_encoder_kernel(x0_hbm_ref, vecs_ref, w1_ref, w2_ref, o_ref, copy_sem,
                         *, skip_connection: bool, eps: float, n_real: int,
                         d_main_p: int, d_hidden_p: int):
    """Grid axis = block index. o_ref is the VMEM-resident activation x."""
    blk = pl.program_id(0)

    # Step 0: pull the precomputed initial activation (Linear(d_in -> d_main),
    # done in the wrapper) into the resident accumulator.  Single DMA; x0
    # never occupies VMEM outside of o_ref itself.
    @pl.when(blk == 0)
    def _():
        cp = pltpu.make_async_copy(x0_hbm_ref, o_ref, copy_sem)
        cp.start()
        cp.wait()

    x = o_ref[...]                                   # (N_p, d_main_p), f32
    n_p = x.shape[0]
    inv_n = 1.0 / n_real

    if n_real < n_p:
        # Padded rows carry garbage after block 0; keep them out of the stats.
        row_mask = (jax.lax.broadcasted_iota(jnp.int32, (n_p, 1), 0)
                    < n_real).astype(jnp.float32)
    else:
        row_mask = None

    # BatchNorm1d, training-mode batch statistics (biased variance), two-pass.
    xs = x if row_mask is None else x * row_mask
    mean = jnp.sum(xs, axis=0, keepdims=True) * inv_n        # (1, d_main_p)
    centered = x - mean
    sq = centered * centered
    if row_mask is not None:
        sq = sq * row_mask
    var = jnp.sum(sq, axis=0, keepdims=True) * inv_n

    vecs = vecs_ref[0]                               # (4, d_max_p), f32
    gamma = vecs[0:1, :d_main_p]
    beta = vecs[1:2, :d_main_p]
    b1 = vecs[2:3, :d_hidden_p]
    b2 = vecs[3:4, :d_main_p]

    h = centered * jax.lax.rsqrt(var + eps) * gamma + beta

    # Linear(d_main -> d_hidden) + ReLU   (Dropout p=0.0 is the identity).
    w1 = w1_ref[0]                                   # (d_main_p, d_hidden_p)
    h = jnp.dot(h.astype(w1.dtype), w1, preferred_element_type=jnp.float32)
    h = jnp.maximum(h + b1, 0.0)

    # Linear(d_hidden -> d_main)
    w2 = w2_ref[0]                                   # (d_hidden_p, d_main_p)
    h = jnp.dot(h.astype(w2.dtype), w2, preferred_element_type=jnp.float32)
    h = h + b2

    o_ref[...] = x + h if skip_connection else h


# ----------------------------------------------------------------------------
# Wrapper
# ----------------------------------------------------------------------------
def _round_up(n, m):
    return ((n + m - 1) // m) * m


def _pad2d(a, rows, cols, dtype):
    """Zero-pad a 2-D array to (rows, cols) and cast to dtype."""
    out = jnp.zeros((rows, cols), dtype)
    return out.at[: a.shape[0], : a.shape[1]].set(a.astype(dtype))


def base_encoder_forward(params, x, *, skip_connection=False,
                         compute_dtype=jnp.bfloat16, eps=1e-5):
    N, d_in = x.shape
    d_main = params["lin_w"].shape[1]
    blocks = params["blocks"]
    n_blocks = len(blocks)

    # Initial Linear(d_in -> d_main): plain XLA matmul in the wrapper
    # (hoisted out of the fused kernel per the performance review).
    x0 = (jnp.dot(x.astype(compute_dtype),
                  params["lin_w"].astype(compute_dtype),
                  preferred_element_type=jnp.float32)
          + params["lin_b"])
    if n_blocks == 0:
        return x0

    d_hidden = blocks[0]["w1"].shape[1]

    # Lane-dense padded feature dims; sublane-padded batch dim.
    d_main_p = _round_up(d_main, LANE)
    d_hidden_p = _round_up(d_hidden, LANE)
    d_max_p = max(d_main_p, d_hidden_p)
    N_p = _round_up(max(N, 8), 8)

    # Zero-padded initial activation (padded feature cols / rows stay handled
    # by zero weight padding + the in-kernel BN row mask).
    x0_p = jnp.zeros((N_p, d_main_p), jnp.float32).at[:N, :d_main].set(x0)

    # Stacked per-block weights in compute_dtype (bf16 by default: halves the
    # per-block weight DMA, native MXU path; f32 accumulation in-kernel).
    w1 = jnp.stack([_pad2d(b["w1"], d_main_p, d_hidden_p, compute_dtype)
                    for b in blocks])
    w2 = jnp.stack([_pad2d(b["w2"], d_hidden_p, d_main_p, compute_dtype)
                    for b in blocks])

    # gamma / beta / b1 / b2 merged into one (n_blocks, 4, d_max_p) f32 tensor.
    # NOTE: padded columns MUST stay zero (keeps padded features exactly zero).
    def _vec_row(v):
        row = jnp.zeros((d_max_p,), jnp.float32)
        return row.at[: v.size].set(v.reshape(-1).astype(jnp.float32))

    vecs = jnp.stack([
        jnp.stack([_vec_row(b["gamma"]), _vec_row(b["beta"]),
                   _vec_row(b["b1"]), _vec_row(b["b2"])])
        for b in blocks
    ])                                                   # (n_blocks, 4, d_max_p)

    kern = functools.partial(
        fused_encoder_kernel,
        skip_connection=skip_connection, eps=eps, n_real=N,
        d_main_p=d_main_p, d_hidden_p=d_hidden_p)

    # Resident-set estimate -> explicit VMEM limit (default scoped limit is
    # 16/32 MiB which is far below what the resident accumulator needs at
    # realistic N).
    wbytes = jnp.dtype(compute_dtype).itemsize
    resident = (
        N_p * d_main_p * 4                        # resident activation (output)
        + 2 * d_main_p * d_hidden_p * wbytes      # W1, double-buffered
        + 2 * d_hidden_p * d_main_p * wbytes      # W2, double-buffered
        + 2 * 8 * d_max_p * 4                     # merged vectors tile
        + N_p * d_hidden_p * 4                    # hidden activation temp
        + 4 * N_p * d_main_p * 4                  # BN / residual temporaries
    )
    vmem_limit = int(min(max(resident + (8 << 20), 16 << 20), 100 << 20))

    flops = n_blocks * (4 * N_p * d_main_p * d_hidden_p + 12 * N_p * d_main_p)
    bytes_accessed = (
        int(x0_p.size) * 4 + int(vecs.size) * 4
        + int(w1.size) * wbytes + int(w2.size) * wbytes
        + N_p * d_main_p * 4)

    out_p = pl.pallas_call(
        kern,
        out_shape=jax.ShapeDtypeStruct((N_p, d_main_p), jnp.float32),
        grid_spec=pltpu.PrefetchScalarGridSpec(
            num_scalar_prefetch=0,
            grid=(n_blocks,),
            in_specs=[
                # Initial activation: raw HBM ref, DMA'd once at step 0.
                pl.BlockSpec(memory_space=pl.ANY),
                # Per-block parameters, pipelined over the block axis.
                pl.BlockSpec((1, 4, d_max_p), lambda b: (b, 0, 0)),           # vecs
                pl.BlockSpec((1, d_main_p, d_hidden_p), lambda b: (b, 0, 0)),  # W1
                pl.BlockSpec((1, d_hidden_p, d_main_p), lambda b: (b, 0, 0)),  # W2
            ],
            # Constant block index -> x is a VMEM-resident accumulator,
            # written back to HBM only once at the end of the grid.
            out_specs=pl.BlockSpec((N_p, d_main_p), lambda b: (0, 0)),
            scratch_shapes=[pltpu.SemaphoreType.DMA],
        ),
        compiler_params=pltpu.CompilerParams(
            dimension_semantics=("arbitrary",),
            vmem_limit_bytes=vmem_limit),
        cost_estimate=pl.CostEstimate(
            flops=int(flops),
            transcendentals=int(n_blocks * d_main_p),
            bytes_accessed=int(bytes_accessed)),
    )(x0_p, vecs, w1, w2)

    return out_p[:N, :d_main]


# ----------------------------------------------------------------------------
# Parameter construction (deterministic, mirrors reset_parameters)
# ----------------------------------------------------------------------------
def kaiming_uniform_t(key, fan_in, fan_out):
    """nn.init.kaiming_uniform_(a=0, nonlinearity='relu') on an (out,in) weight,
    returned already transposed to (in, out)."""
    bound = math.sqrt(2.0) * math.sqrt(3.0 / fan_in)
    return jax.random.uniform(key, (fan_in, fan_out), jnp.float32,
                              minval=-bound, maxval=bound)


def init_base_encoder(key, d_in, d_main, d_multiplier=2.0, n_blocks=1):
    d_hidden = int(d_main * d_multiplier)
    keys = jax.random.split(key, 1 + 2 * n_blocks)
    params = {
        "lin_w": kaiming_uniform_t(keys[0], d_in, d_main),
        "lin_b": jnp.zeros((1, d_main), jnp.float32),
        "blocks": [],
    }
    for i in range(n_blocks):
        params["blocks"].append({
            "gamma": jnp.ones((1, d_main), jnp.float32),
            "beta": jnp.zeros((1, d_main), jnp.float32),
            "w1": kaiming_uniform_t(keys[1 + 2 * i], d_main, d_hidden),
            "b1": jnp.zeros((1, d_hidden), jnp.float32),
            "w2": kaiming_uniform_t(keys[2 + 2 * i], d_hidden, d_main),
            "b2": jnp.zeros((1, d_main), jnp.float32),
        })
    return params


# Pure-JAX reference. compute_dtype mirrors the kernel's matmul-operand cast.
def base_encoder_ref(params, x, *, skip_connection=False, eps=1e-5,
                     compute_dtype=jnp.bfloat16):
    def mm(a, w):
        return jnp.dot(a.astype(compute_dtype), w.astype(compute_dtype),
                       preferred_element_type=jnp.float32)

    x = mm(x, params["lin_w"]) + params["lin_b"]
    for blk in params["blocks"]:
        mean = jnp.mean(x, axis=0, keepdims=True)
        var = jnp.mean((x - mean) ** 2, axis=0, keepdims=True)
        h = (x - mean) / jnp.sqrt(var + eps) * blk["gamma"] + blk["beta"]
        h = jnp.maximum(mm(h, blk["w1"]) + blk["b1"], 0.0)
        h = mm(h, blk["w2"]) + blk["b2"]
        x = x + h if skip_connection else h
    return x


# ----------------------------------------------------------------------------
if __name__ == "__main__":
    d_in, d_main, d_multiplier, n_blocks = 16, 32, 2.0, 2
    N = 8
    skip = True

    key = jax.random.PRNGKey(0)
    pkey, xkey = jax.random.split(key)
    params = init_base_encoder(pkey, d_in, d_main, d_multiplier, n_blocks)
    x = jax.random.normal(xkey, (N, d_in), jnp.float32)

    # Default path: bf16 matmul operands (native MXU path on v5e/v6e/v7x),
    # f32 accumulation / BN / bias / ReLU.  Compared against a reference that
    # applies the same operand quantization.
    out = jax.block_until_ready(
        base_encoder_forward(params, x, skip_connection=skip))
    ref = base_encoder_ref(params, x, skip_connection=skip,
                           compute_dtype=jnp.bfloat16)
    assert out.shape == (N, d_main)
    assert jnp.allclose(out, ref, atol=3e-2, rtol=3e-2), \
        "bf16 mismatch vs bf16-quantized reference"

    # f32 matmul path (numerics baseline).  Loose tolerance covers the
    # difference between XLA's and Mosaic's default f32 matmul lowerings.
    out_f32 = jax.block_until_ready(
        base_encoder_forward(params, x, skip_connection=skip,
                             compute_dtype=jnp.float32))
    ref_f32 = base_encoder_ref(params, x, skip_connection=skip,
                               compute_dtype=jnp.float32)
    assert jnp.allclose(out_f32, ref_f32, atol=2e-2, rtol=2e-2), \
        "f32 mismatch vs f32 reference"

    print("KERNEL_OK")
</pallas_src>

<mosaic_0001>
module attributes {stable_mosaic.version = 11 : i64} {
  func.func @fused_encoder_kernel(%arg0: i32, %arg1: memref<8x128xf32, #tpu.memory_space<any>>, %arg2: memref<1x4x128xf32, #tpu.memory_space<vmem>>, %arg3: memref<1x128x128xbf16, #tpu.memory_space<vmem>>, %arg4: memref<1x128x128xbf16, #tpu.memory_space<vmem>>, %arg5: memref<8x128xf32, #tpu.memory_space<vmem>>, %arg6: memref<!tpu.dma_semaphore, #tpu.memory_space<semaphore_mem>>) attributes {dimension_semantics = [#tpu.dimension_semantics<arbitrary>], iteration_bounds = array<i64: 2>, scalar_prefetch = 0 : i64, scratch_operands = 1 : i64, tpu.core_type = #tpu.core_type<tc>, window_params = [{}, {transform_indices = @transform_1, window_bounds = array<i64: 1, 4, 128>}, {transform_indices = @transform_2, window_bounds = array<i64: 1, 128, 128>}, {transform_indices = @transform_3, window_bounds = array<i64: 1, 128, 128>}, {pipeline_mode = #tpu.pipeline_mode<synchronous>, transform_indices = @transform_4, window_bounds = array<i64: 8, 128>}]} {
    %c0_i32 = arith.constant 0 : i32
    %0 = arith.cmpi eq, %arg0, %c0_i32 : i32
    %1 = arith.extui %0 : i1 to i32
    %c0_i32_0 = arith.constant 0 : i32
    %2 = arith.cmpi ne, %1, %c0_i32_0 : i32
    scf.if %2 {
      tpu.enqueue_dma source(%arg1 : memref<8x128xf32, #tpu.memory_space<any>>) target(%arg5 : memref<8x128xf32, #tpu.memory_space<vmem>>) target_semaphore(%arg6 : memref<!tpu.dma_semaphore, #tpu.memory_space<semaphore_mem>>)
      tpu.wait_dma2 semaphore(%arg6 : memref<!tpu.dma_semaphore, #tpu.memory_space<semaphore_mem>>) src(%arg1 : memref<8x128xf32, #tpu.memory_space<any>>) dst(%arg5 : memref<8x128xf32, #tpu.memory_space<vmem>>)
    } else {
    }
    %c0 = arith.constant 0 : index
    %c0_1 = arith.constant 0 : index
    %3 = vector.load %arg5[%c0, %c0_1] : memref<8x128xf32, #tpu.memory_space<vmem>>, vector<8x128xf32>
    %cst = arith.constant dense<0.000000e+00> : vector<128xf32>
    %4 = vector.multi_reduction <add>, %3, %cst [0] : vector<8x128xf32> to vector<128xf32>
    %5 = vector.shape_cast %4 : vector<128xf32> to vector<1x128xf32>
    %cst_2 = arith.constant 1.250000e-01 : f32
    %6 = vector.broadcast %cst_2 : f32 to vector<1x128xf32>
    %7 = arith.mulf %5, %6 : vector<1x128xf32>
    %8 = vector.broadcast %7 : vector<1x128xf32> to vector<8x128xf32>
    %9 = arith.subf %3, %8 : vector<8x128xf32>
    %10 = arith.mulf %9, %9 : vector<8x128xf32>
    %cst_3 = arith.constant dense<0.000000e+00> : vector<128xf32>
    %11 = vector.multi_reduction <add>, %10, %cst_3 [0] : vector<8x128xf32> to vector<128xf32>
    %12 = vector.shape_cast %11 : vector<128xf32> to vector<1x128xf32>
    %cst_4 = arith.constant 1.250000e-01 : f32
    %13 = vector.broadcast %cst_4 : f32 to vector<1x128xf32>
    %14 = arith.mulf %12, %13 : vector<1x128xf32>
    %c0_5 = arith.constant 0 : index
    %c0_6 = arith.constant 0 : index
    %c0_7 = arith.constant 0 : index
    %15 = vector.load %arg2[%c0_5, %c0_6, %c0_7] : memref<1x4x128xf32, #tpu.memory_space<vmem>>, vector<1x4x128xf32>
    %16 = vector.shape_cast %15 : vector<1x4x128xf32> to vector<4x128xf32>
    %17 = vector.extract_strided_slice %16 {offsets = [0, 0], sizes = [1, 128], strides = [1, 1]} : vector<4x128xf32> to vector<1x128xf32>
    %18 = vector.extract_strided_slice %16 {offsets = [1, 0], sizes = [1, 128], strides = [1, 1]} : vector<4x128xf32> to vector<1x128xf32>
    %19 = vector.extract_strided_slice %16 {offsets = [2, 0], sizes = [1, 128], strides = [1, 1]} : vector<4x128xf32> to vector<1x128xf32>
    %20 = vector.extract_strided_slice %16 {offsets = [3, 0], sizes = [1, 128], strides = [1, 1]} : vector<4x128xf32> to vector<1x128xf32>
    %cst_8 = arith.constant 9.99999974E-6 : f32
    %21 = vector.broadcast %cst_8 : f32 to vector<1x128xf32>
    %22 = arith.addf %14, %21 : vector<1x128xf32>
    %23 = math.rsqrt %22 : vector<1x128xf32>
    %24 = vector.broadcast %23 : vector<1x128xf32> to vector<8x128xf32>
    %25 = arith.mulf %9, %24 : vector<8x128xf32>
    %26 = vector.broadcast %17 : vector<1x128xf32> to vector<8x128xf32>
    %27 = arith.mulf %25, %26 : vector<8x128xf32>
    %28 = vector.broadcast %18 : vector<1x128xf32> to vector<8x128xf32>
    %29 = arith.addf %27, %28 : vector<8x128xf32>
    %c0_9 = arith.constant 0 : index
    %c0_10 = arith.constant 0 : index
    %c0_11 = arith.constant 0 : index
    %30 = vector.load %arg3[%c0_9, %c0_10, %c0_11] : memref<1x128x128xbf16, #tpu.memory_space<vmem>>, vector<1x128x128xbf16>
    %31 = vector.shape_cast %30 : vector<1x128x128xbf16> to vector<128x128xbf16>
    %32 = arith.truncf %29 : vector<8x128xf32> to vector<8x128xbf16>
    %cst_12 = arith.constant dense<0.000000e+00> : vector<8x128xf32>
    %33 = tpu.matmul %32, %31, %cst_12 {dimension_numbers = #tpu.dot_dimension_numbers<[1], [0], [0], [1], [0, 0, 1, 1], [], []>} : vector<8x128xbf16>, vector<128x128xbf16>, vector<8x128xf32> -> vector<8x128xf32>
    %34 = vector.broadcast %19 : vector<1x128xf32> to vector<8x128xf32>
    %35 = arith.addf %33, %34 : vector<8x128xf32>
    %cst_13 = arith.constant 0.000000e+00 : f32
    %36 = vector.broadcast %cst_13 : f32 to vector<8x128xf32>
    %37 = arith.maximumf %35, %36 : vector<8x128xf32>
    %c0_14 = arith.constant 0 : index
    %c0_15 = arith.constant 0 : index
    %c0_16 = arith.constant 0 : index
    %38 = vector.load %arg4[%c0_14, %c0_15, %c0_16] : memref<1x128x128xbf16, #tpu.memory_space<vmem>>, vector<1x128x128xbf16>
    %39 = vector.shape_cast %38 : vector<1x128x128xbf16> to vector<128x128xbf16>
    %40 = arith.truncf %37 : vector<8x128xf32> to vector<8x128xbf16>
    %cst_17 = arith.constant dense<0.000000e+00> : vector<8x128xf32>
    %41 = tpu.matmul %40, %39, %cst_17 {dimension_numbers = #tpu.dot_dimension_numbers<[1], [0], [0], [1], [0, 0, 1, 1], [], []>} : vector<8x128xbf16>, vector<128x128xbf16>, vector<8x128xf32> -> vector<8x128xf32>
    %42 = vector.broadcast %20 : vector<1x128xf32> to vector<8x128xf32>
    %43 = arith.addf %41, %42 : vector<8x128xf32>
    %44 = arith.addf %3, %43 : vector<8x128xf32>
    %c0_18 = arith.constant 0 : index
    %c0_19 = arith.constant 0 : index
    %45 = vector.load %arg5[%c0_18, %c0_19] : memref<8x128xf32, #tpu.memory_space<vmem>>, vector<8x128xf32>
    tpu.vector_store %arg5[%c0_18, %c0_19], %44 {strides = array<i32>} : memref<8x128xf32, #tpu.memory_space<vmem>>, vector<8x128xf32>,
    return
  }
  func.func @transform_1(%arg0: i32) -> (i32, i32, i32) {
    %c0_i32 = arith.constant 0 : i32
    %c0_i32_0 = arith.constant 0 : i32
    %c0_i32_1 = arith.constant 0 : i32
    return %arg0, %c0_i32, %c0_i32_0 : i32, i32, i32
  }
  func.func @transform_2(%arg0: i32) -> (i32, i32, i32) {
    %c0_i32 = arith.constant 0 : i32
    %c0_i32_0 = arith.constant 0 : i32
    %c0_i32_1 = arith.constant 0 : i32
    return %arg0, %c0_i32, %c0_i32_0 : i32, i32, i32
  }
  func.func @transform_3(%arg0: i32) -> (i32, i32, i32) {
    %c0_i32 = arith.constant 0 : i32
    %c0_i32_0 = arith.constant 0 : i32
    %c0_i32_1 = arith.constant 0 : i32
    return %arg0, %c0_i32, %c0_i32_0 : i32, i32, i32
  }
  func.func @transform_4(%arg0: i32) -> (i32, i32) {
    %c0_i32 = arith.constant 0 : i32
    %c0_i32_0 = arith.constant 0 : i32
    %c0_i32_1 = arith.constant 0 : i32
    return %c0_i32, %c0_i32_0 : i32, i32
  }
}

</mosaic_0001>

<llo_original>
// kernel: tpu_custom_call.1
$region0: #{tpu_custom_call.1}
  #allocation0 [shape = 'u32[]', space=smem, size = 0x4, offset = 0x4, fixed_abs, tag = 'smem constant byte address 0x4 - core index']
  #allocation1 [shape = 'u32[144,128]{1,0:T(1,128)}', space=vmem, size = 0x12000, scoped, tag = 'internal scratch']
  #allocation2 [shape = 's32[1]{0}', space=sflag, size = 0x4, scoped, tag = 'scratch operand']
  #allocation10 [shape = 's32[]', space=sflag, size = 0x4, offset = 0, fixed_abs, tag = 'sflag constant byte address 0x0 - dummy sync flag']
  #allocation11 [shape = 's32[]', space=sflag, size = 0x4, offset = 0, fixed_abs, tag = 'sflag constant byte address 0x0 - dummy sync flag']
  #allocation12 [shape = 'u32[]', space=smem, size = 0x4, offset = 0x44, fixed_abs, tag = 'smem constant byte address 0x44 - assertion arg 0']
  #allocation13 [shape = 'u32[]', space=smem, size = 0x4, offset = 0x48, fixed_abs, tag = 'smem constant byte address 0x48 - assertion arg 1']
  %s0 = inlined_call_operand.hbm [shape: f32[8,128], index: 0, kind: input, shape index: {}]
  %s1 = inlined_call_operand.hbm [shape: f32[2,4,128], index: 1, kind: input, shape index: {}]
  %s2 = inlined_call_operand.hbm [shape: bf16[2,128,128], index: 2, kind: input, shape index: {}]
  %s3 = inlined_call_operand.hbm [shape: bf16[2,128,128], index: 3, kind: input, shape index: {}]
  %s4 = inlined_call_operand.hbm [shape: f32[8,128], index: 4, kind: output, shape index: {}]
  %s5 = sld [smem:[#allocation0]]
  $region65: #{tpu_custom_call.1} parent=0
    _
  %s7 = ssub.s32 1, %s5
  %s8 = scalar_select 0, %s7, %s5
  $region1: #{tpu_custom_call.1} parent=0
    #allocation3 [shape = 'u8[4096]{0}', space=vmem, size = 0x1000, scoped, tag = 'input window, operand 1']
    #allocation4 [shape = 's32[2]{0}', space=sflag, size = 0x8, scoped, tag = 'scoped memory for tpu_custom_call.1']
    #allocation5 [shape = 's32[2]{0}', space=sflag, size = 0x8, scoped, tag = 'scoped memory for tpu_custom_call.1']
    #allocation6 [shape = 'u8[65536]{0}', space=vmem, size = 0x10000, scoped, tag = 'input window, operand 2']
    #allocation7 [shape = 's32[2]{0}', space=sflag, size = 0x8, scoped, tag = 'scoped memory for tpu_custom_call.1']
    #allocation8 [shape = 'u8[65536]{0}', space=vmem, size = 0x10000, scoped, tag = 'input window, operand 3']
    #allocation9 [shape = 'u8[4096]{0}', space=vmem, size = 0x1000, scoped, tag = 'output window, operand 0, single buffered']
    %9 = vsyncpa [#allocation4], 0
    %s10 = scalar_lea.sflag [#allocation4], 1
    %11 = vsyncpa %s10, 0
    %12 = vsyncpa [#allocation7], 0
    %s13 = scalar_lea.sflag [#allocation7], 1
    %14 = vsyncpa %s13, 0
    %15 = vsyncpa [#allocation5], 0
    loop: start=0, step=1, limit=4
    $region2: #{tpu_custom_call.1} parent=1 // loop_pre_header
      _
    $region3: #{tpu_custom_call.1} parent=1 // loop_header
      %s17 = sphi 0, %s21
      %p18 = scmp.ge.s32.totalorder %s17, 4
      %s27 = sphi 0, %s29
      %s30 = sphi 0, %s27
      %s31 = sphi 0, %s30
      %s47 = sphi 0, %s31
      %s53 = sphi 0, %s55
      %s56 = sphi 0, %s53
      %s57 = sphi 0, %s56
      %s73 = sphi 0, %s57
      %s79 = sphi 0, %s81
      %s82 = sphi 0, %s79
      %s83 = sphi 0, %s82
      %s99 = sphi 0, %s83
      %s103 = sphi 0, %s103
      %s105 = sphi 0, %s103
      %s106 = sphi 0, %s105
      %s120 = sphi 0, %s106
    $region4: #{tpu_custom_call.1} parent=1 // loop_header_branch
      %20 = sbr.rel (%p18) target = $region8
    $region5: #{tpu_custom_call.1} parent=1 // loop_body
      %s22 = ssub.s32 %s17, 1
      %s23 = ssub.s32 %s17, 2
      %s24 = sadd.s32 %s17, 1
      %s25 = ssub.s32 %s17, %s24
      %p26 = scmp.eq.s32.totalorder %s25, 0
      %s28 = sadd.s32 %s27, 1
      %s29 = scalar_select %p26, %s27, %s28
      %p32 = pneg %p26
      %p33 = scmp.eq.s32.totalorder %s17, 1
      %p34 = por %p32, %p33
      %p35 = scmp.ne.s32.totalorder %s27, %s30
      %p36 = scmp.eq.s32.totalorder %s17, 0
      %p37 = por %p35, %p36
      %p38 = scmp.ne.s32.totalorder %s27, %s30
      %p39 = scmp.eq.s32.totalorder %s22, 1
      %p40 = por %p38, %p39
      %p41 = scmp.ne.s32.totalorder %s30, %s31
      %p42 = scmp.eq.s32.totalorder %s22, 0
      %p43 = por %p41, %p42
      %p44 = scmp.ne.s32.totalorder %s30, %s31
      %p45 = scmp.eq.s32.totalorder %s23, 1
      %p46 = por %p44, %p45
      %p48 = scmp.ne.s32.totalorder %s31, %s47
      %p49 = scmp.eq.s32.totalorder %s23, 0
      %p50 = por %p48, %p49
      %s51 = ssub.s32 %s17, %s24
      %p52 = scmp.eq.s32.totalorder %s51, 0
      %s54 = sadd.s32 %s53, 1
      %s55 = scalar_select %p52, %s53, %s54
      %p58 = pneg %p52
      %p59 = scmp.eq.s32.totalorder %s17, 1
      %p60 = por %p58, %p59
      %p61 = scmp.ne.s32.totalorder %s53, %s56
      %p62 = scmp.eq.s32.totalorder %s17, 0
      %p63 = por %p61, %p62
      %p64 = scmp.ne.s32.totalorder %s53, %s56
      %p65 = scmp.eq.s32.totalorder %s22, 1
      %p66 = por %p64, %p65
      %p67 = scmp.ne.s32.totalorder %s56, %s57
      %p68 = scmp.eq.s32.totalorder %s22, 0
      %p69 = por %p67, %p68
      %p70 = scmp.ne.s32.totalorder %s56, %s57
      %p71 = scmp.eq.s32.totalorder %s23, 1
      %p72 = por %p70, %p71
      %p74 = scmp.ne.s32.totalorder %s57, %s73
      %p75 = scmp.eq.s32.totalorder %s23, 0
      %p76 = por %p74, %p75
      %s77 = ssub.s32 %s17, %s24
      %p78 = scmp.eq.s32.totalorder %s77, 0
      %s80 = sadd.s32 %s79, 1
      %s81 = scalar_select %p78, %s79, %s80
      %p84 = pneg %p78
      %p85 = scmp.eq.s32.totalorder %s17, 1
      %p86 = por %p84, %p85
      %p87 = scmp.ne.s32.totalorder %s79, %s82
      %p88 = scmp.eq.s32.totalorder %s17, 0
      %p89 = por %p87, %p88
      %p90 = scmp.ne.s32.totalorder %s79, %s82
      %p91 = scmp.eq.s32.totalorder %s22, 1
      %p92 = por %p90, %p91
      %p93 = scmp.ne.s32.totalorder %s82, %s83
      %p94 = scmp.eq.s32.totalorder %s22, 0
      %p95 = por %p93, %p94
      %p96 = scmp.ne.s32.totalorder %s82, %s83
      %p97 = scmp.eq.s32.totalorder %s23, 1
      %p98 = por %p96, %p97
      %p100 = scmp.ne.s32.totalorder %s83, %s99
      %p101 = scmp.eq.s32.totalorder %s23, 0
      %p102 = por %p100, %p101
      %s104 = sadd.s32 %s103, 1
      %p107 = scmp.eq.s32.totalorder %s17, 1
      %p108 = scmp.ne.s32.totalorder %s103, %s105
      %p109 = scmp.eq.s32.totalorder %s17, 0
      %p110 = por %p108, %p109
      %p111 = scmp.ne.s32.totalorder %s103, %s105
      %p112 = scmp.eq.s32.totalorder %s22, 1
      %p113 = por %p111, %p112
      %p114 = scmp.ne.s32.totalorder %s105, %s106
      %p115 = scmp.eq.s32.totalorder %s22, 0
      %p116 = por %p114, %p115
      %p117 = scmp.ne.s32.totalorder %s105, %s106
      %p118 = scmp.eq.s32.totalorder %s23, 1
      %p119 = por %p117, %p118
      %p121 = scmp.ne.s32.totalorder %s106, %s120
      %p122 = scmp.eq.s32.totalorder %s23, 0
      %p123 = por %p121, %p122
      %p124 = scmp.le.s32.totalorder 1, %s17
      %p125 = scmp.lt.s32.totalorder %s17, 3
      %p126 = pnand %p124, %p125
      %p127 = pneg %p126
      // Predicated region
      $region9: #{tpu_custom_call.1} parent=5 // pred_check
        _
      $region10: #{tpu_custom_call.1} parent=5 // pred_check_branch
        %129 = sbr.rel (%p126) target = $region12
      $region11: #{tpu_custom_call.1} parent=5 // pred_region
        %s130 = ssub.s32 %s17, 1
      $region12: #{tpu_custom_call.1} parent=5 // pred_fallthru
        _
      %p131 = scmp.lt.s32.totalorder %s17, 2
      // Predicated region
      $region13: #{tpu_custom_call.1} parent=5 // pred_check
        %p132 = pneg %p131
      $region14: #{tpu_custom_call.1} parent=5 // pred_check_branch
        %134 = sbr.rel (%p132) target = $region16
      $region15: #{tpu_custom_call.1} parent=5 // pred_region
        // Predicated region
        $region17: #{tpu_custom_call.1} parent=15 // pred_check
          %p135 = pneg %p37
        $region18: #{tpu_custom_call.1} parent=15 // pred_check_branch
          %137 = sbr.rel (%p135) target = $region20
        $region19: #{tpu_custom_call.1} parent=15 // pred_region
          %s138 = sand.u32 %s27, 1
          %s139 = scalar_lea.sflag [#allocation4], %s138
          %s140 = sand.u32 %s27, 1
          %s141 = smul.addr %s140, 4
          %s142 = scalar_lea.vmem [#allocation3], %s141
          %s144 = ssub.s32 64, 64
          %145 = vsyncadd %s139, %s144
          %s146 = smul.addr %s17, 64
          %s147 = scalar_lea.hbm %s1, %s146
          %s149 = sshll.u32 %s142, 4
          %s150 = int_to_ptr.vmem [resolvable:$true] %s149
          %152 = dma.hbm_to_vmem [thread:$0]  %s147, 64, %s150, %s139
        $region20: #{tpu_custom_call.1} parent=15 // pred_fallthru
          _
        // Predicated region
        $region21: #{tpu_custom_call.1} parent=15 // pred_check
          %p153 = pneg %p63
        $region22: #{tpu_custom_call.1} parent=15 // pred_check_branch
          %155 = sbr.rel (%p153) target = $region24
        $region23: #{tpu_custom_call.1} parent=15 // pred_region
          %s156 = sand.u32 %s17, 1
          %s157 = scalar_lea.sflag [#allocation7], %s156
          %s158 = sand.u32 %s53, 1
          %s159 = smul.addr %s158, 64
          %s160 = scalar_lea.vmem [#allocation6], %s159
          %s162 = ssub.s32 1024, 1024
          %163 = vsyncadd %s157, %s162
          %s164 = smul.addr %s17, 16
          %s165 = smul.addr %s164, 64
          %s166 = scalar_lea.hbm %s2, %s165
          %s167 = sshll.u32 %s160, 4
          %s168 = int_to_ptr.vmem [resolvable:$true] %s167
          %173 = dma.hbm_to_vmem [thread:$0]  %s166, 1024, %s168, %s157, 64, 64, 4
        $region24: #{tpu_custom_call.1} parent=15 // pred_fallthru
          _
        // Predicated region
        $region25: #{tpu_custom_call.1} parent=15 // pred_check
          %p174 = pneg %p89
        $region26: #{tpu_custom_call.1} parent=15 // pred_check_branch
          %176 = sbr.rel (%p174) target = $region28
        $region27: #{tpu_custom_call.1} parent=15 // pred_region
          %s177 = sand.u32 %s17, 1
          %s178 = scalar_lea.sflag [#allocation7], %s177
          %s179 = sand.u32 %s79, 1
          %s180 = smul.addr %s179, 64
          %s181 = scalar_lea.vmem [#allocation8], %s180
          %s183 = ssub.s32 1024, 1024
          %184 = vsyncadd %s178, %s183
          %s185 = smul.addr %s17, 16
          %s186 = smul.addr %s185, 64
          %s187 = scalar_lea.hbm %s3, %s186
          %s188 = sshll.u32 %s181, 4
          %s189 = int_to_ptr.vmem [resolvable:$true] %s188
          %194 = dma.hbm_to_vmem [thread:$0]  %s187, 1024, %s189, %s178, 64, 64, 4
        $region28: #{tpu_custom_call.1} parent=15 // pred_fallthru
          _
      $region16: #{tpu_custom_call.1} parent=5 // pred_fallthru
        _
      %p195 = scmp.le.s32.totalorder 1, %s17
      %p196 = scmp.lt.s32.totalorder %s17, 3
      %p197 = pnand %p195, %p196
      %p198 = pneg %p197
      // Predicated region
      $region29: #{tpu_custom_call.1} parent=5 // pred_check
        _
      $region30: #{tpu_custom_call.1} parent=5 // pred_check_branch
        %200 = sbr.rel (%p197) target = $region32
      $region31: #{tpu_custom_call.1} parent=5 // pred_region
        %s201 = ssub.s32 %s17, 1
        %s202 = sand.u32 %s30, 1
        %s203 = scalar_lea.sflag [#allocation4], %s202
        %s204 = sand.u32 %s30, 1
        %s205 = smul.addr %s204, 4
        %s206 = scalar_lea.vmem [#allocation3], %s205
        // Predicated region
        $region33: #{tpu_custom_call.1} parent=31 // pred_check
          %p207 = pneg %p43
        $region34: #{tpu_custom_call.1} parent=31 // pred_check_branch
          %209 = sbr.rel (%p207) target = $region36
        $region35: #{tpu_custom_call.1} parent=31 // pred_region
          %210 = dma.done %s203, 64
        $region36: #{tpu_custom_call.1} parent=31 // pred_fallthru
          _
        %s211 = sand.u32 %s22, 1
        %s212 = scalar_lea.sflag [#allocation7], %s211
        %s213 = sand.u32 %s56, 1
        %s214 = smul.addr %s213, 64
        %s215 = scalar_lea.vmem [#allocation6], %s214
        // Predicated region
        $region37: #{tpu_custom_call.1} parent=31 // pred_check
          %p216 = pneg %p69
        $region38: #{tpu_custom_call.1} parent=31 // pred_check_branch
          %218 = sbr.rel (%p216) target = $region40
        $region39: #{tpu_custom_call.1} parent=31 // pred_region
          %219 = dma.done %s212, 1024
        $region40: #{tpu_custom_call.1} parent=31 // pred_fallthru
          _
        %s220 = sand.u32 %s22, 1
        %s221 = scalar_lea.sflag [#allocation7], %s220
        %s222 = sand.u32 %s82, 1
        %s223 = smul.addr %s222, 64
        %s224 = scalar_lea.vmem [#allocation8], %s223
        // Predicated region
        $region41: #{tpu_custom_call.1} parent=31 // pred_check
          %p225 = pneg %p95
        $region42: #{tpu_custom_call.1} parent=31 // pred_check_branch
          %227 = sbr.rel (%p225) target = $region44
        $region43: #{tpu_custom_call.1} parent=31 // pred_region
          %228 = dma.done %s221, 1024
        $region44: #{tpu_custom_call.1} parent=31 // pred_fallthru
          _
        %s229 = sand.u32 %s30, 1
        %s230 = scalar_lea.sflag [#allocation4], %s229
        %s231 = sand.u32 %s30, 1
        %s232 = smul.addr %s231, 4
        %s233 = scalar_lea.vmem [#allocation3], %s232
        %p234 = pneg %p43
        %p235 = pneg %p40
        %s236 = sand.u32 %s22, 1
        %s237 = scalar_lea.sflag [#allocation7], %s236
        %s238 = sand.u32 %s56, 1
        %s239 = smul.addr %s238, 64
        %s240 = scalar_lea.vmem [#allocation6], %s239
        %p241 = pneg %p69
        %p242 = pneg %p66
        %s243 = sand.u32 %s22, 1
        %s244 = scalar_lea.sflag [#allocation7], %s243
        %s245 = sand.u32 %s82, 1
        %s246 = smul.addr %s245, 64
        %s247 = scalar_lea.vmem [#allocation8], %s246
        %p248 = pneg %p95
        %p249 = pneg %p92
        %p250 = pneg %p116
        %p251 = pneg %p113
        %p253 = scmp.eq.s32.totalorder %s22, 0
        // Predicated region
        $region45: #{tpu_custom_call.1} parent=31 // pred_check
          %p254 = pneg %p253
        $region46: #{tpu_custom_call.1} parent=31 // pred_check_branch
          %256 = sbr.rel (%p254) target = $region48
        $region47: #{tpu_custom_call.1} parent=31 // pred_region
          // Predicated region
          $region49: #{tpu_custom_call.1} parent=47 // pred_check
            _
          $region50: #{tpu_custom_call.1} parent=47 // pred_check_branch
            %258 = sbr.rel target = $region52
          $region51: #{tpu_custom_call.1} parent=47 // pred_region
            %259 = sst [smem:[#allocation12]] [#allocation11]
            %260 = sst [smem:[#allocation13]] [#allocation10]
          $region52: #{tpu_custom_call.1} parent=47 // pred_fallthru
            _
          %262 = shalt.err (0)
          %s264 = sshll.u32 [#allocation9], 4
          %s265 = int_to_ptr.vmem [resolvable:$true] %s264
          %267 = dma.hbm_to_vmem [thread:$0]  %s0, 128, %s265, [#allocation2]
          %s268 = smul.u32 8, 1
          %s269 = sshll.u32 %s268, 4
          %270 = dma.done [#allocation2], %s269
        $region48: #{tpu_custom_call.1} parent=31 // pred_fallthru
          _
        %v271 = vld [vmem:[#allocation9] sm:$0xff]
        %v272 = vrot.slane %v271, 4
        %v273 = vadd.f32 %v271, %v272
        %v274 = vrot.slane %v273, 2
        %v275 = vadd.f32 %v273, %v274
        %v276 = vrot.slane %v275, 1
        %v277 = vadd.f32 %v275, %v276
        %v278 = vmul.f32 %v277, 0.125
        %v279 = vsub.f32 %v271, %v278
        %v280 = vmul.f32 %v279, %v279
        %v281 = vrot.slane %v280, 4
        %v282 = vadd.f32 %v280, %v281
        %v283 = vrot.slane %v282, 2
        %v284 = vadd.f32 %v282, %v283
        %v285 = vrot.slane %v284, 1
        %v286 = vadd.f32 %v284, %v285
        %v287 = vmul.f32 %v286, 0.125
        %v288 = vld [vmem:[%s206] sm:$0xf]
        %v289 = vadd.f32 %v287, 1e-05
        %v290 = vrsqrt.pop %v289
        %v291 = vmul.f32 %v279, %v290
        %v292 = vlaneseq
        %v293 = vshrl.u32 %v292, 7
        %v294 = vsub.s32 0, %v293
        %v295 = vrot.slane %v288, %v294
        %v296 = vmul.f32 %v291, %v295
        %v297 = vlaneseq
        %v298 = vshrl.u32 %v297, 7
        %v299 = vsub.s32 1, %v298
        %v300 = vrot.slane %v288, %v299
        %v301 = vadd.f32 %v296, %v300
        %v302 = vld [vmem:[%s215] sm:$0xf]
        %v303 = vld [vmem:[%s215 + $0x4] sm:$0xf]
        %v304 = vld [vmem:[%s215 + $0x8] sm:$0xf]
        %v305 = vld [vmem:[%s215 + $0xc] sm:$0xf]
        %v306 = vld [vmem:[%s215 + $0x10] sm:$0xf]
        %v307 = vld [vmem:[%s215 + $0x14] sm:$0xf]
        %v308 = vld [vmem:[%s215 + $0x18] sm:$0xf]
        %v309 = vld [vmem:[%s215 + $0x1c] sm:$0xf]
        %v310 = vld [vmem:[%s215 + $0x20] sm:$0xf]
        %v311 = vld [vmem:[%s215 + $0x24] sm:$0xf]
        %v312 = vld [vmem:[%s215 + $0x28] sm:$0xf]
        %v313 = vld [vmem:[%s215 + $0x2c] sm:$0xf]
        %v314 = vld [vmem:[%s215 + $0x30] sm:$0xf]
        %v315 = vld [vmem:[%s215 + $0x34] sm:$0xf]
        %v316 = vld [vmem:[%s215 + $0x38] sm:$0xf]
        %v317 = vld [vmem:[%s215 + $0x3c] sm:$0xf]
        %v318 = vpack.c.bf16 %v301, %v301
        %v319 = vlaneseq
        %v320 = vshrl.u32 %v319, 7
        %v321 = vsub.s32 2, %v320
        %v322 = vrot.slane %v288, %v321
        %v339 = vunpack.c.l.b16 %v302
        %v340 = vunpack.c.l.b16 %v303
        %v341 = vunpack.c.l.b16 %v304
        %v342 = vunpack.c.l.b16 %v305
        %v343 = vunpack.c.l.b16 %v306
        %v344 = vunpack.c.l.b16 %v307
        %v345 = vunpack.c.l.b16 %v308
        %v346 = vunpack.c.l.b16 %v309
        %v347 = vunpack.c.l.b16 %v310
        %v348 = vunpack.c.l.b16 %v311
        %v349 = vunpack.c.l.b16 %v312
        %v350 = vunpack.c.l.b16 %v313
        %v351 = vunpack.c.l.b16 %v314
        %v352 = vunpack.c.l.b16 %v315
        %v353 = vunpack.c.l.b16 %v316
        %v354 = vunpack.c.l.b16 %v317
        %v355 = vpack.c.b16 %v340, %v339
        %v356 = vpack.c.b16 %v342, %v341
        %v357 = vpack.c.b16 %v344, %v343
        %v358 = vpack.c.b16 %v346, %v345
        %v359 = vpack.c.b16 %v348, %v347
        %v360 = vpack.c.b16 %v350, %v349
        %v361 = vpack.c.b16 %v352, %v351
        %v362 = vpack.c.b16 %v354, %v353
        %371 = vmatprep.subr.bf16.mxu0 0
        %372 = vmatpush1.bf16.msra.mxu0 %v362
        %373 = vmatprep.subr.bf16.mxu0 0
        %374 = vmatpush1.bf16.msra.mxu0 %v361
        %375 = vmatprep.subr.bf16.mxu0 0
        %376 = vmatpush1.bf16.msra.mxu0 %v360
        %377 = vmatprep.subr.bf16.mxu0 0
        %378 = vmatpush1.bf16.msra.mxu0 %v359
        %379 = vmatprep.subr.bf16.mxu0 0
        %380 = vmatpush1.bf16.msra.mxu0 %v358
        %381 = vmatprep.subr.bf16.mxu0 0
        %382 = vmatpush1.bf16.msra.mxu0 %v357
        %383 = vmatprep.subr.bf16.mxu0 0
        %384 = vmatpush1.bf16.msra.mxu0 %v356
        %385 = vmatprep.subr.bf16.mxu0 0
        %386 = vmatpush1.bf16.msra.mxu0 %v355
        %387 = vmatprep.subr.bf16.mxu0 0
        %388 = vmatpush2.bf16.msra.mxu0 0
        %389 = vmatprep.subr.bf16.mxu0 0
        %390 = vmatpush2.bf16.msra.mxu0 0
        %391 = vmatprep.subr.bf16.mxu0 0
        %392 = vmatpush2.bf16.msra.mxu0 0
        %393 = vmatprep.subr.bf16.mxu0 0
        %394 = vmatpush2.bf16.msra.mxu0 0
        %395 = vmatprep.subr.bf16.mxu0 0
        %396 = vmatpush2.bf16.msra.mxu0 0
        %397 = vmatprep.subr.bf16.mxu0 0
        %398 = vmatpush2.bf16.msra.mxu0 0
        %399 = vmatprep.subr.bf16.mxu0 0
        %400 = vmatpush2.bf16.msra.mxu0 0
        %401 = vmatprep.subr.bf16.mxu0 0
        %402 = vmatpush2.bf16.msra.mxu0 0
        %403 = vmatprep.mubr.bf16.mxu0 0
        %404 = vmatmul.mubr.bf16.gmra.mxu0 %v318
        %v405 = vpop.f32.mrf.mxu0
        %v406 = vadd.f32 %v322, %v405
        %v407 = vpop.f32.mrf.mxu0
        %v408 = vpop.f32.mrf.mxu0
        %v409 = vpop.f32.mrf.mxu0
        %410 = vdwg.mxu0
        %v411 = vmax.f32 %v406, 0.0
        %v412 = vld [vmem:[%s224] sm:$0xf]
        %v413 = vld [vmem:[%s224 + $0x4] sm:$0xf]
        %v414 = vld [vmem:[%s224 + $0x8] sm:$0xf]
        %v415 = vld [vmem:[%s224 + $0xc] sm:$0xf]
        %v416 = vld [vmem:[%s224 + $0x10] sm:$0xf]
        %v417 = vld [vmem:[%s224 + $0x14] sm:$0xf]
        %v418 = vld [vmem:[%s224 + $0x18] sm:$0xf]
        %v419 = vld [vmem:[%s224 + $0x1c] sm:$0xf]
        %v420 = vld [vmem:[%s224 + $0x20] sm:$0xf]
        %v421 = vld [vmem:[%s224 + $0x24] sm:$0xf]
        %v422 = vld [vmem:[%s224 + $0x28] sm:$0xf]
        %v423 = vld [vmem:[%s224 + $0x2c] sm:$0xf]
        %v424 = vld [vmem:[%s224 + $0x30] sm:$0xf]
        %v425 = vld [vmem:[%s224 + $0x34] sm:$0xf]
        %v426 = vld [vmem:[%s224 + $0x38] sm:$0xf]
        %v427 = vld [vmem:[%s224 + $0x3c] sm:$0xf]
        %v428 = vpack.c.bf16 %v411, %v411
        %v429 = vlaneseq
        %v430 = vshrl.u32 %v429, 7
        %v431 = vsub.s32 3, %v430
        %v432 = vrot.slane %v288, %v431
        %v449 = vunpack.c.l.b16 %v412
        %v450 = vunpack.c.l.b16 %v413
        %v451 = vunpack.c.l.b16 %v414
        %v452 = vunpack.c.l.b16 %v415
        %v453 = vunpack.c.l.b16 %v416
        %v454 = vunpack.c.l.b16 %v417
        %v455 = vunpack.c.l.b16 %v418
        %v456 = vunpack.c.l.b16 %v419
        %v457 = vunpack.c.l.b16 %v420
        %v458 = vunpack.c.l.b16 %v421
        %v459 = vunpack.c.l.b16 %v422
        %v460 = vunpack.c.l.b16 %v423
        %v461 = vunpack.c.l.b16 %v424
        %v462 = vunpack.c.l.b16 %v425
        %v463 = vunpack.c.l.b16 %v426
        %v464 = vunpack.c.l.b16 %v427
        %v465 = vpack.c.b16 %v450, %v449
        %v466 = vpack.c.b16 %v452, %v451
        %v467 = vpack.c.b16 %v454, %v453
        %v468 = vpack.c.b16 %v456, %v455
        %v469 = vpack.c.b16 %v458, %v457
        %v470 = vpack.c.b16 %v460, %v459
        %v471 = vpack.c.b16 %v462, %v461
        %v472 = vpack.c.b16 %v464, %v463
        %481 = vmatprep.subr.bf16.mxu0 0
        %482 = vmatpush1.bf16.msra.mxu0 %v472
        %483 = vmatprep.subr.bf16.mxu0 0
        %484 = vmatpush1.bf16.msra.mxu0 %v471
        %485 = vmatprep.subr.bf16.mxu0 0
        %486 = vmatpush1.bf16.msra.mxu0 %v470
        %487 = vmatprep.subr.bf16.mxu0 0
        %488 = vmatpush1.bf16.msra.mxu0 %v469
        %489 = vmatprep.subr.bf16.mxu0 0
        %490 = vmatpush1.bf16.msra.mxu0 %v468
        %491 = vmatprep.subr.bf16.mxu0 0
        %492 = vmatpush1.bf16.msra.mxu0 %v467
        %493 = vmatprep.subr.bf16.mxu0 0
        %494 = vmatpush1.bf16.msra.mxu0 %v466
        %495 = vmatprep.subr.bf16.mxu0 0
        %496 = vmatpush1.bf16.msra.mxu0 %v465
        %497 = vmatprep.subr.bf16.mxu0 0
        %498 = vmatpush2.bf16.msra.mxu0 0
        %499 = vmatprep.subr.bf16.mxu0 0
        %500 = vmatpush2.bf16.msra.mxu0 0
        %501 = vmatprep.subr.bf16.mxu0 0
        %502 = vmatpush2.bf16.msra.mxu0 0
        %503 = vmatprep.subr.bf16.mxu0 0
        %504 = vmatpush2.bf16.msra.mxu0 0
        %505 = vmatprep.subr.bf16.mxu0 0
        %506 = vmatpush2.bf16.msra.mxu0 0
        %507 = vmatprep.subr.bf16.mxu0 0
        %508 = vmatpush2.bf16.msra.mxu0 0
        %509 = vmatprep.subr.bf16.mxu0 0
        %510 = vmatpush2.bf16.msra.mxu0 0
        %511 = vmatprep.subr.bf16.mxu0 0
        %512 = vmatpush2.bf16.msra.mxu0 0
        %513 = vmatprep.mubr.bf16.mxu0 0
        %514 = vmatmul.mubr.bf16.gmra.mxu0 %v428
        %v515 = vpop.f32.mrf.mxu0
        %v516 = vadd.f32 %v432, %v515
        %v517 = vpop.f32.mrf.mxu0
        %v518 = vpop.f32.mrf.mxu0
        %v519 = vpop.f32.mrf.mxu0
        %520 = vdwg.mxu0
        %v521 = vadd.f32 %v271, %v516
        %522 = vst [vmem:[#allocation9] sm:$0xff] %v521
        // Predicated region
        $region53: #{tpu_custom_call.1} parent=31 // pred_check
          %p523 = pneg %p113
        $region54: #{tpu_custom_call.1} parent=31 // pred_check_branch
          %525 = sbr.rel (%p523) target = $region56
        $region55: #{tpu_custom_call.1} parent=31 // pred_region
          %s527 = ssub.s32 128, 128
          %528 = vsyncadd [#allocation5], %s527
          %s530 = sshll.u32 [#allocation9], 4
          %s531 = int_to_ptr.vmem [resolvable:$true] %s530
          %533 = dma.vmem_to_hbm [thread:$0]  %s531, 128, %s4, [#allocation5]
        $region56: #{tpu_custom_call.1} parent=31 // pred_fallthru
          _
        // Predicated region
        $region57: #{tpu_custom_call.1} parent=31 // pred_check
          %p534 = pneg %p113
        $region58: #{tpu_custom_call.1} parent=31 // pred_check_branch
          %536 = sbr.rel (%p534) target = $region60
        $region59: #{tpu_custom_call.1} parent=31 // pred_region
          %537 = dma.done [#allocation5], 128
        $region60: #{tpu_custom_call.1} parent=31 // pred_fallthru
          _
      $region32: #{tpu_custom_call.1} parent=5 // pred_fallthru
        _
      %p538 = scmp.le.s32.totalorder 2, %s17
      // Predicated region
      $region61: #{tpu_custom_call.1} parent=5 // pred_check
        %p539 = pneg %p538
      $region62: #{tpu_custom_call.1} parent=5 // pred_check_branch
        %541 = sbr.rel (%p539) target = $region64
      $region63: #{tpu_custom_call.1} parent=5 // pred_region
        %s542 = ssub.s32 %s17, 2
      $region64: #{tpu_custom_call.1} parent=5 // pred_fallthru
        _
    $region6: #{tpu_custom_call.1} parent=1 // loop_footer
      %s21 = sadd.s32 1, %s17
    $region7: #{tpu_custom_call.1} parent=1 // loop_footer_branch
      %16 = sbr.rel target = $region3
    $region8: #{tpu_custom_call.1} parent=1 // loop_exit
      _
    %543 = vsyncpa [#allocation4], 1
    %s544 = scalar_lea.sflag [#allocation4], 1
    %545 = vsyncpa %s544, 1
    %546 = vsyncpa [#allocation7], 1
    %s547 = scalar_lea.sflag [#allocation7], 1
    %548 = vsyncpa %s547, 1
    %549 = vsyncpa [#allocation5], 1
    %s550 = scalar_lea.sflag [#allocation5], 1
    %551 = vsyncpa %s550, 1
  %552 = vsyncmov [#allocation2]
  %s553 = vpop.sfrf %552
  %p554 = scmp.eq.s32.totalorder %s553, 0
  %p555 = pneg %p554
  %557 = shalt.err (%p555)

</llo_original>
